<compile_context>
chip_gen: v7x
topology: tpu7x:2x2x1
jax: 0.10.0
libtpu: 0.0.40
codegen_flags: <defaults>
</compile_context>

<pallas_src>
import functools

import jax
import jax.numpy as jnp
from jax import lax
from jax.experimental import pallas as pl
from jax.experimental.pallas import tpu as pltpu

NEG = -1e30        # sentinel for "no candidate" (Python float, not a jnp array)
VALID_MIN = -5e29  # anything above this is a real (above-threshold) score


def _round_up(x, m):
    return ((x + m - 1) // m) * m


def _filter_detections_kernel(
    scores_ref,      # (1, C_pad, KP)    f32  per-class top-K candidate scores
    coords_ref,      # (1, 4*C_pad, KP)  f32  [x1|y1|x2|y2] rows per class
    boxes_out_ref,   # (1, 4, MD_pad)    f32
    scores_out_ref,  # (1, 1, MD_pad)    f32
    labels_out_ref,  # (1, 1, MD_pad)    i32
    s_scr,           # (C_pad, KP)       f32  VMEM scratch: live (suppressed) scores
    cand_s_ref,      # (C_pad, KP)       f32  VMEM scratch: per-class kept scores (descending)
    cand_i_ref,      # (C_pad, KP)       i32  VMEM scratch: lane index of each kept candidate
    alive_ref,       # (1,)              i32  SMEM scratch: any candidate left?
    *,
    nms_threshold,
    score_threshold,
    max_iters,       # NMS picks per class = K (pre-NMS top-K per class)
    num_picks,       # global output picks = min(max_detections, C * K)
):
    c_pad = scores_ref.shape[1]
    kp = scores_ref.shape[2]
    md_pad = scores_out_ref.shape[2]

    # Per-class candidate coordinates: classes on sublanes, candidates on lanes.
    x1 = coords_ref[0, 0 * c_pad:1 * c_pad, :]
    y1 = coords_ref[0, 1 * c_pad:2 * c_pad, :]
    x2 = coords_ref[0, 2 * c_pad:3 * c_pad, :]
    y2 = coords_ref[0, 3 * c_pad:4 * c_pad, :]
    # TODO(synk): utils_anchors.box_nms IoU convention unknown; using the standard
    # (x2-x1)*(y2-y1) area without the +1 pixel offset.
    area = jnp.maximum(x2 - x1, 0.0) * jnp.maximum(y2 - y1, 0.0)          # (C_pad, KP)

    raw = scores_ref[0]                                                    # (C_pad, KP)
    s0 = jnp.where(raw > score_threshold, raw, NEG)                        # score prefilter

    lane_iota = lax.broadcasted_iota(jnp.int32, (1, kp), 1)                # broadcast iotas
    row_iota = lax.broadcasted_iota(jnp.int32, (c_pad, 1), 0)
    out_col = lax.broadcasted_iota(jnp.int32, (1, md_pad), 1)

    # ---- stage 1: greedy NMS, all classes in parallel, early-exit via SMEM flag ----
    s_scr[...] = s0
    cand_s_ref[...] = jnp.full((c_pad, kp), NEG, jnp.float32)
    cand_i_ref[...] = jnp.zeros((c_pad, kp), jnp.int32)
    alive_ref[0] = (jnp.max(s0) > VALID_MIN).astype(jnp.int32)

    @pl.loop(0, max_iters)
    def _nms_step(k):
        @pl.when(alive_ref[0] == 1)
        def _():
            s = s_scr[...]
            v = jnp.max(s, axis=-1, keepdims=True)                         # (C_pad, 1)
            idx = jnp.min(jnp.where(s == v, lane_iota, kp),
                          axis=-1, keepdims=True)                          # first argmax
            pick = lane_iota == idx                                        # (C_pad, KP)

            px1 = jnp.sum(jnp.where(pick, x1, 0.0), axis=-1, keepdims=True)
            py1 = jnp.sum(jnp.where(pick, y1, 0.0), axis=-1, keepdims=True)
            px2 = jnp.sum(jnp.where(pick, x2, 0.0), axis=-1, keepdims=True)
            py2 = jnp.sum(jnp.where(pick, y2, 0.0), axis=-1, keepdims=True)
            parea = jnp.maximum(px2 - px1, 0.0) * jnp.maximum(py2 - py1, 0.0)

            ix1 = jnp.maximum(x1, px1)
            iy1 = jnp.maximum(y1, py1)
            ix2 = jnp.minimum(x2, px2)
            iy2 = jnp.minimum(y2, py2)
            inter = jnp.maximum(ix2 - ix1, 0.0) * jnp.maximum(iy2 - iy1, 0.0)
            union = area + parea - inter
            # iou > thr  <=>  inter > thr * union   (divide-free)
            new_s = jnp.where((inter > nms_threshold * union) | pick, NEG, s)
            s_scr[...] = new_s

            # record candidate column k of every class (small post-top-K slab)
            at_k = lane_iota == k
            cand_s_ref[...] = jnp.where(at_k, v, cand_s_ref[...])
            cand_i_ref[...] = jnp.where(at_k, idx, cand_i_ref[...])

            alive_ref[0] = (jnp.max(new_s) > VALID_MIN).astype(jnp.int32)

    # ---- stage 2: global top-k = merge of per-class descending candidate lists ----
    # TODO(synk): tie-break for exactly-equal scores picks the lowest class index, which may
    # differ from the reference's stable-sort ordering.
    def topk_body(d, carry):
        frontier, ptr, osc, olab, ox1, oy1, ox2, oy2 = carry
        v = jnp.max(frontier)                                              # best remaining score
        valid = v > VALID_MIN
        c_star = jnp.min(jnp.where(frontier == v, row_iota, c_pad))        # its class
        p_star = jnp.sum(jnp.where(row_iota == c_star, ptr, 0))            # rank within class

        # lane index (within the per-class candidate pool) of the picked box
        irow = cand_i_ref[pl.ds(c_star, 1), :]                             # (1, KP)
        picked = jnp.sum(jnp.where(lane_iota == p_star, irow, 0))

        # gather its 4 coordinates from that class's coordinate rows
        box = []
        for j in range(4):
            crow = coords_ref[0, pl.ds(j * c_pad + c_star, 1), :]          # (1, KP)
            box.append(jnp.sum(jnp.where(lane_iota == picked, crow, 0.0)))

        at_d = out_col == d
        osc = jnp.where(at_d, jnp.where(valid, v, -1.0), osc)
        olab = jnp.where(at_d, jnp.where(valid, c_star, -1), olab)
        upd = at_d & valid
        ox1 = jnp.where(upd, box[0], ox1)
        oy1 = jnp.where(upd, box[1], oy1)
        ox2 = jnp.where(upd, box[2], ox2)
        oy2 = jnp.where(upd, box[3], oy2)

        # advance this class's pointer and refresh its frontier score
        new_p = p_star + 1
        srow = cand_s_ref[pl.ds(c_star, 1), :]                             # (1, KP)
        next_v = jnp.max(jnp.where(lane_iota == new_p, srow, NEG))
        at_c = (row_iota == c_star) & valid
        frontier = jnp.where(at_c, next_v, frontier)
        ptr = jnp.where(at_c, new_p, ptr)
        return frontier, ptr, osc, olab, ox1, oy1, ox2, oy2

    topk_init = (
        cand_s_ref[...][:, 0:1],                       # per-class frontier = best NMS keep
        jnp.zeros((c_pad, 1), jnp.int32),              # per-class pointer
        jnp.full((1, md_pad), -1.0, jnp.float32),      # scores  (padding = -1.0)
        jnp.full((1, md_pad), -1, jnp.int32),          # labels  (padding = -1)
        jnp.zeros((1, md_pad), jnp.float32),           # x1
        jnp.zeros((1, md_pad), jnp.float32),           # y1
        jnp.zeros((1, md_pad), jnp.float32),           # x2
        jnp.zeros((1, md_pad), jnp.float32),           # y2
    )
    _, _, osc, olab, ox1, oy1, ox2, oy2 = lax.fori_loop(
        0, num_picks, topk_body, topk_init)

    boxes_out_ref[0, :, :] = jnp.concatenate([ox1, oy1, ox2, oy2], axis=0)
    scores_out_ref[0, :, :] = osc
    labels_out_ref[0, :, :] = olab


def filter_detections(boxes, classification, *, nms_threshold=0.5,
                      score_threshold=0.05, max_detections=300):
    """boxes: (B, N, 4) f32 [x1,y1,x2,y2], classification: (B, N, C) f32."""
    boxes = boxes.astype(jnp.float32)
    classification = classification.astype(jnp.float32)
    B, N, _ = boxes.shape
    C = classification.shape[2]
    md = int(max_detections)

    md_pad = _round_up(md, 128)          # lane-dense output width
    c_pad = _round_up(C, 8)              # classes padded to a sublane multiple
    k_keep = min(N, md)                  # pre-NMS top-K per class (== per-class NMS pick budget)
    kp = _round_up(k_keep, 128)          # lane-dense candidate-pool width
    num_picks = min(md, C * k_keep)

    # ---- pre-NMS per-class top-K over the anchor axis (shrinks the NMS slab from (C, N)
    # to (C, K) and makes the working set fit v5e/v7x VMEM at realistic detector sizes).
    # TODO(synk): if more than K=min(N, max_detections) anchors of a class pass the score
    # threshold AND earlier NMS picks suppress many of them, the reference could keep a box
    # outside the per-class top-K; this standard pre-NMS top-K is an approximation there.
    cls_t = jnp.transpose(classification, (0, 2, 1))              # (B, C, N)
    top_scores, top_idx = lax.top_k(cls_t, k_keep)                # (B, C, K), descending
    gathered = jax.vmap(lambda bx, idx: bx[idx])(boxes, top_idx)  # (B, C, K, 4)
    coords = jnp.transpose(gathered, (0, 3, 1, 2))                # (B, 4, C, K)

    # pad classes -> C_pad (sublanes) and candidates -> KP (lanes)
    top_scores = jnp.pad(top_scores, ((0, 0), (0, c_pad - C), (0, kp - k_keep)),
                         constant_values=NEG)
    coords = jnp.pad(coords, ((0, 0), (0, 0), (0, c_pad - C), (0, kp - k_keep)))
    coords = coords.reshape(B, 4 * c_pad, kp)                     # rows: [x1|y1|x2|y2] x C_pad

    kernel = functools.partial(
        _filter_detections_kernel,
        nms_threshold=float(nms_threshold),
        score_threshold=float(score_threshold),
        max_iters=k_keep,
        num_picks=num_picks,
    )

    out_shapes = (
        jax.ShapeDtypeStruct((B, 4, md_pad), jnp.float32),
        jax.ShapeDtypeStruct((B, 1, md_pad), jnp.float32),
        jax.ShapeDtypeStruct((B, 1, md_pad), jnp.int32),
    )

    boxes_o, scores_o, labels_o = pl.pallas_call(
        kernel,
        out_shape=out_shapes,
        grid_spec=pltpu.PrefetchScalarGridSpec(
            num_scalar_prefetch=0,
            grid=(B,),
            in_specs=[
                pl.BlockSpec((1, c_pad, kp), lambda b: (b, 0, 0)),
                pl.BlockSpec((1, 4 * c_pad, kp), lambda b: (b, 0, 0)),
            ],
            out_specs=[
                pl.BlockSpec((1, 4, md_pad), lambda b: (b, 0, 0)),
                pl.BlockSpec((1, 1, md_pad), lambda b: (b, 0, 0)),
                pl.BlockSpec((1, 1, md_pad), lambda b: (b, 0, 0)),
            ],
            scratch_shapes=[
                pltpu.VMEM((c_pad, kp), jnp.float32),   # live scores
                pltpu.VMEM((c_pad, kp), jnp.float32),   # kept scores per class
                pltpu.VMEM((c_pad, kp), jnp.int32),     # kept candidate indices
                pltpu.SMEM((1,), jnp.int32),            # any-remaining flag
            ],
        ),
        compiler_params=pltpu.CompilerParams(
            dimension_semantics=("parallel",),
            vmem_limit_bytes=32 * 1024 * 1024,
        ),
    )(top_scores, coords)

    # TODO(synk): on v7x with B==1, a second "parallel" grid axis over class groups (NMS is
    # class-independent) would use the second TensorCore; not implemented here.
    boxes_final = jnp.transpose(boxes_o[:, :, :md], (0, 2, 1))    # (B, md, 4)
    return boxes_final, scores_o[:, 0, :md], labels_o[:, 0, :md]


if __name__ == "__main__":
    # Small synthetic problem: B=2 images, N=32 anchors, C=3 classes,
    # keep at most 8 detections per image.
    B, N, C = 2, 32, 3
    MAX_DET = 8

    key = jax.random.PRNGKey(0)
    k1, k2, k3 = jax.random.split(key, 3)

    xy1 = jax.random.uniform(k1, (B, N, 2), jnp.float32, 0.0, 50.0)
    wh = jax.random.uniform(k2, (B, N, 2), jnp.float32, 1.0, 20.0)
    boxes = jnp.concatenate([xy1, xy1 + wh], axis=-1)                # (B, N, 4)
    classification = jax.random.uniform(k3, (B, N, C), jnp.float32)  # (B, N, C)

    boxes_out, scores_out, labels_out = filter_detections(
        boxes, classification,
        nms_threshold=0.5, score_threshold=0.05, max_detections=MAX_DET)

    jax.block_until_ready((boxes_out, scores_out, labels_out))
    assert boxes_out.shape == (B, MAX_DET, 4)
    assert scores_out.shape == (B, MAX_DET)
    assert labels_out.shape == (B, MAX_DET)
    print("KERNEL_OK")
</pallas_src>

<mosaic_0001>
module attributes {stable_mosaic.version = 11 : i64} {
  func.func @_filter_detections_kernel(%arg0: i32, %arg1: memref<1x8x128xf32, #tpu.memory_space<vmem>>, %arg2: memref<1x32x128xf32, #tpu.memory_space<vmem>>, %arg3: memref<1x4x128xf32, #tpu.memory_space<vmem>>, %arg4: memref<1x1x128xf32, #tpu.memory_space<vmem>>, %arg5: memref<1x1x128xi32, #tpu.memory_space<vmem>>, %arg6: memref<8x128xf32, #tpu.memory_space<vmem>>, %arg7: memref<8x128xf32, #tpu.memory_space<vmem>>, %arg8: memref<8x128xi32, #tpu.memory_space<vmem>>, %arg9: memref<1xi32, #tpu.memory_space<smem>>) attributes {dimension_semantics = [#tpu.dimension_semantics<parallel>], iteration_bounds = array<i64: 2>, scalar_prefetch = 0 : i64, scratch_operands = 4 : i64, tpu.core_type = #tpu.core_type<tc>, window_params = [{transform_indices = @transform_0, window_bounds = array<i64: 1, 8, 128>}, {transform_indices = @transform_1, window_bounds = array<i64: 1, 32, 128>}, {transform_indices = @transform_2, window_bounds = array<i64: 1, 4, 128>}, {transform_indices = @transform_3, window_bounds = array<i64: 1, 1, 128>}, {transform_indices = @transform_4, window_bounds = array<i64: 1, 1, 128>}]} {
    %c0 = arith.constant 0 : index
    %c0_0 = arith.constant 0 : index
    %c0_1 = arith.constant 0 : index
    %0 = vector.load %arg2[%c0, %c0_0, %c0_1] : memref<1x32x128xf32, #tpu.memory_space<vmem>>, vector<1x8x128xf32>
    %1 = vector.shape_cast %0 : vector<1x8x128xf32> to vector<8x128xf32>
    %c0_2 = arith.constant 0 : index
    %c8 = arith.constant 8 : index
    %c0_3 = arith.constant 0 : index
    %2 = vector.load %arg2[%c0_2, %c8, %c0_3] : memref<1x32x128xf32, #tpu.memory_space<vmem>>, vector<1x8x128xf32>
    %3 = vector.shape_cast %2 : vector<1x8x128xf32> to vector<8x128xf32>
    %c0_4 = arith.constant 0 : index
    %c16 = arith.constant 16 : index
    %c0_5 = arith.constant 0 : index
    %4 = vector.load %arg2[%c0_4, %c16, %c0_5] : memref<1x32x128xf32, #tpu.memory_space<vmem>>, vector<1x8x128xf32>
    %5 = vector.shape_cast %4 : vector<1x8x128xf32> to vector<8x128xf32>
    %c0_6 = arith.constant 0 : index
    %c24 = arith.constant 24 : index
    %c0_7 = arith.constant 0 : index
    %6 = vector.load %arg2[%c0_6, %c24, %c0_7] : memref<1x32x128xf32, #tpu.memory_space<vmem>>, vector<1x8x128xf32>
    %7 = vector.shape_cast %6 : vector<1x8x128xf32> to vector<8x128xf32>
    %8 = arith.subf %5, %1 : vector<8x128xf32>
    %cst = arith.constant 0.000000e+00 : f32
    %9 = vector.broadcast %cst : f32 to vector<8x128xf32>
    %10 = arith.maximumf %8, %9 : vector<8x128xf32>
    %11 = arith.subf %7, %3 : vector<8x128xf32>
    %cst_8 = arith.constant 0.000000e+00 : f32
    %12 = vector.broadcast %cst_8 : f32 to vector<8x128xf32>
    %13 = arith.maximumf %11, %12 : vector<8x128xf32>
    %14 = arith.mulf %10, %13 : vector<8x128xf32>
    %c0_9 = arith.constant 0 : index
    %c0_10 = arith.constant 0 : index
    %c0_11 = arith.constant 0 : index
    %15 = vector.load %arg1[%c0_9, %c0_10, %c0_11] : memref<1x8x128xf32, #tpu.memory_space<vmem>>, vector<1x8x128xf32>
    %16 = vector.shape_cast %15 : vector<1x8x128xf32> to vector<8x128xf32>
    %cst_12 = arith.constant 5.000000e-02 : f32
    %17 = vector.broadcast %cst_12 : f32 to vector<8x128xf32>
    %18 = arith.cmpf ogt, %16, %17 : vector<8x128xf32>
    %cst_13 = arith.constant -1.000000e+30 : f32
    %19 = vector.broadcast %cst_13 : f32 to vector<8x128xf32>
    %20 = arith.select %18, %16, %19 : vector<8x128xi1>, vector<8x128xf32>
    %21 = tpu.iota {dimensions = array<i32: 1>} : vector<1x128xi32>
    %22 = tpu.iota {dimensions = array<i32: 0>} : vector<8x1xi32>
    %23 = tpu.iota {dimensions = array<i32: 1>} : vector<1x128xi32>
    %c0_14 = arith.constant 0 : index
    %c0_15 = arith.constant 0 : index
    %24 = vector.load %arg6[%c0_14, %c0_15] : memref<8x128xf32, #tpu.memory_space<vmem>>, vector<8x128xf32>
    tpu.vector_store %arg6[%c0_14, %c0_15], %20 {strides = array<i32>} : memref<8x128xf32, #tpu.memory_space<vmem>>, vector<8x128xf32>,
    %cst_16 = arith.constant -1.000000e+30 : f32
    %25 = vector.broadcast %cst_16 : f32 to vector<8x128xf32>
    %c0_17 = arith.constant 0 : index
    %c0_18 = arith.constant 0 : index
    %26 = vector.load %arg7[%c0_17, %c0_18] : memref<8x128xf32, #tpu.memory_space<vmem>>, vector<8x128xf32>
    tpu.vector_store %arg7[%c0_17, %c0_18], %25 {strides = array<i32>} : memref<8x128xf32, #tpu.memory_space<vmem>>, vector<8x128xf32>,
    %c0_i32 = arith.constant 0 : i32
    %27 = vector.broadcast %c0_i32 : i32 to vector<8x128xi32>
    %c0_19 = arith.constant 0 : index
    %c0_20 = arith.constant 0 : index
    %28 = vector.load %arg8[%c0_19, %c0_20] : memref<8x128xi32, #tpu.memory_space<vmem>>, vector<8x128xi32>
    tpu.vector_store %arg8[%c0_19, %c0_20], %27 {strides = array<i32>} : memref<8x128xi32, #tpu.memory_space<vmem>>, vector<8x128xi32>,
    %29 = vector.shape_cast %20 : vector<8x128xf32> to vector<1x8x128xf32>
    %cst_21 = arith.constant dense<0xFF800000> : vector<1xf32>
    %30 = vector.multi_reduction <maximumf>, %29, %cst_21 [1, 2] : vector<1x8x128xf32> to vector<1xf32>
    %31 = vector.shape_cast %30 : vector<1xf32> to vector<1x1x1xf32>
    %32 = vector.extract %31[0, 0, 0] : f32 from vector<1x1x1xf32>
    %cst_22 = arith.constant -5.000000e+29 : f32
    %33 = arith.cmpf ogt, %32, %cst_22 : f32
    %34 = arith.extui %33 : i1 to i32
    %c0_23 = arith.constant 0 : index
    %35 = memref.load %arg9[%c0_23] : memref<1xi32, #tpu.memory_space<smem>>
    memref.store %34, %arg9[%c0_23] : memref<1xi32, #tpu.memory_space<smem>>
    %c0_i32_24 = arith.constant 0 : i32
    %c8_i32 = arith.constant 8 : i32
    %36 = arith.addi %c0_i32_24, %c8_i32 : i32
    %c1_i32 = arith.constant 1 : i32
    scf.for %arg10 = %c0_i32_24 to %36 step %c1_i32  : i32 {
      %c1_i32_47 = arith.constant 1 : i32
      %58 = arith.muli %arg10, %c1_i32_47 : i32
      %c0_i32_48 = arith.constant 0 : i32
      %59 = arith.addi %c0_i32_48, %58 : i32
      %c0_49 = arith.constant 0 : index
      %60 = memref.load %arg9[%c0_49] : memref<1xi32, #tpu.memory_space<smem>>
      %c1_i32_50 = arith.constant 1 : i32
      %61 = arith.cmpi eq, %60, %c1_i32_50 : i32
      %62 = arith.extui %61 : i1 to i32
      %c0_i32_51 = arith.constant 0 : i32
      %63 = arith.cmpi ne, %62, %c0_i32_51 : i32
      scf.if %63 {
        %c0_52 = arith.constant 0 : index
        %c0_53 = arith.constant 0 : index
        %64 = vector.load %arg6[%c0_52, %c0_53] : memref<8x128xf32, #tpu.memory_space<vmem>>, vector<8x128xf32>
        %cst_54 = arith.constant dense<0xFF800000> : vector<8xf32>
        %65 = vector.multi_reduction <maximumf>, %64, %cst_54 [1] : vector<8x128xf32> to vector<8xf32>
        %66 = vector.shape_cast %65 : vector<8xf32> to vector<8x1xf32>
        %67 = vector.broadcast %66 : vector<8x1xf32> to vector<8x128xf32>
        %68 = arith.cmpf oeq, %64, %67 : vector<8x128xf32>
        %c128_i32 = arith.constant 128 : i32
        %69 = vector.shape_cast %21 : vector<1x128xi32> to vector<1x128xi32>
        %70 = vector.broadcast %69 : vector<1x128xi32> to vector<8x128xi32>
        %71 = vector.broadcast %c128_i32 : i32 to vector<8x128xi32>
        %72 = arith.select %68, %70, %71 : vector<8x128xi1>, vector<8x128xi32>
        %cst_55 = arith.constant dense<2147483647> : vector<8xi32>
        %73 = vector.multi_reduction <minsi>, %72, %cst_55 [1] : vector<8x128xi32> to vector<8xi32>
        %74 = vector.shape_cast %73 : vector<8xi32> to vector<8x1xi32>
        %75 = vector.broadcast %21 : vector<1x128xi32> to vector<8x128xi32>
        %76 = vector.broadcast %74 : vector<8x1xi32> to vector<8x128xi32>
        %77 = arith.cmpi eq, %75, %76 : vector<8x128xi32>
        %cst_56 = arith.constant 0.000000e+00 : f32
        %78 = vector.broadcast %cst_56 : f32 to vector<8x128xf32>
        %79 = arith.select %77, %1, %78 : vector<8x128xi1>, vector<8x128xf32>
        %cst_57 = arith.constant dense<0.000000e+00> : vector<8xf32>
        %80 = vector.multi_reduction <add>, %79, %cst_57 [1] : vector<8x128xf32> to vector<8xf32>
        %81 = vector.shape_cast %80 : vector<8xf32> to vector<8x1xf32>
        %cst_58 = arith.constant 0.000000e+00 : f32
        %82 = vector.broadcast %cst_58 : f32 to vector<8x128xf32>
        %83 = arith.select %77, %3, %82 : vector<8x128xi1>, vector<8x128xf32>
        %cst_59 = arith.constant dense<0.000000e+00> : vector<8xf32>
        %84 = vector.multi_reduction <add>, %83, %cst_59 [1] : vector<8x128xf32> to vector<8xf32>
        %85 = vector.shape_cast %84 : vector<8xf32> to vector<8x1xf32>
        %cst_60 = arith.constant 0.000000e+00 : f32
        %86 = vector.broadcast %cst_60 : f32 to vector<8x128xf32>
        %87 = arith.select %77, %5, %86 : vector<8x128xi1>, vector<8x128xf32>
        %cst_61 = arith.constant dense<0.000000e+00> : vector<8xf32>
        %88 = vector.multi_reduction <add>, %87, %cst_61 [1] : vector<8x128xf32> to vector<8xf32>
        %89 = vector.shape_cast %88 : vector<8xf32> to vector<8x1xf32>
        %cst_62 = arith.constant 0.000000e+00 : f32
        %90 = vector.broadcast %cst_62 : f32 to vector<8x128xf32>
        %91 = arith.select %77, %7, %90 : vector<8x128xi1>, vector<8x128xf32>
        %cst_63 = arith.constant dense<0.000000e+00> : vector<8xf32>
        %92 = vector.multi_reduction <add>, %91, %cst_63 [1] : vector<8x128xf32> to vector<8xf32>
        %93 = vector.shape_cast %92 : vector<8xf32> to vector<8x1xf32>
        %94 = arith.subf %89, %81 : vector<8x1xf32>
        %cst_64 = arith.constant 0.000000e+00 : f32
        %95 = vector.broadcast %cst_64 : f32 to vector<8x1xf32>
        %96 = arith.maximumf %94, %95 : vector<8x1xf32>
        %97 = arith.subf %93, %85 : vector<8x1xf32>
        %cst_65 = arith.constant 0.000000e+00 : f32
        %98 = vector.broadcast %cst_65 : f32 to vector<8x1xf32>
        %99 = arith.maximumf %97, %98 : vector<8x1xf32>
        %100 = arith.mulf %96, %99 : vector<8x1xf32>
        %101 = vector.broadcast %81 : vector<8x1xf32> to vector<8x128xf32>
        %102 = arith.maximumf %1, %101 : vector<8x128xf32>
        %103 = vector.broadcast %85 : vector<8x1xf32> to vector<8x128xf32>
        %104 = arith.maximumf %3, %103 : vector<8x128xf32>
        %105 = vector.broadcast %89 : vector<8x1xf32> to vector<8x128xf32>
        %106 = arith.minimumf %5, %105 : vector<8x128xf32>
        %107 = vector.broadcast %93 : vector<8x1xf32> to vector<8x128xf32>
        %108 = arith.minimumf %7, %107 : vector<8x128xf32>
        %109 = arith.subf %106, %102 : vector<8x128xf32>
        %cst_66 = arith.constant 0.000000e+00 : f32
        %110 = vector.broadcast %cst_66 : f32 to vector<8x128xf32>
        %111 = arith.maximumf %109, %110 : vector<8x128xf32>
        %112 = arith.subf %108, %104 : vector<8x128xf32>
        %cst_67 = arith.constant 0.000000e+00 : f32
        %113 = vector.broadcast %cst_67 : f32 to vector<8x128xf32>
        %114 = arith.maximumf %112, %113 : vector<8x128xf32>
        %115 = arith.mulf %111, %114 : vector<8x128xf32>
        %116 = vector.broadcast %100 : vector<8x1xf32> to vector<8x128xf32>
        %117 = arith.addf %14, %116 : vector<8x128xf32>
        %118 = arith.subf %117, %115 : vector<8x128xf32>
        %cst_68 = arith.constant 5.000000e-01 : f32
        %119 = vector.broadcast %cst_68 : f32 to vector<8x128xf32>
        %120 = arith.mulf %119, %118 : vector<8x128xf32>
        %121 = arith.cmpf ogt, %115, %120 : vector<8x128xf32>
        %122 = arith.ori %121, %77 : vector<8x128xi1>
        %cst_69 = arith.constant -1.000000e+30 : f32
        %123 = vector.broadcast %cst_69 : f32 to vector<8x128xf32>
        %124 = arith.select %122, %123, %64 : vector<8x128xi1>, vector<8x128xf32>
        %c0_70 = arith.constant 0 : index
        %c0_71 = arith.constant 0 : index
        %125 = vector.load %arg6[%c0_70, %c0_71] : memref<8x128xf32, #tpu.memory_space<vmem>>, vector<8x128xf32>
        tpu.vector_store %arg6[%c0_70, %c0_71], %124 {strides = array<i32>} : memref<8x128xf32, #tpu.memory_space<vmem>>, vector<8x128xf32>,
        %126 = vector.broadcast %59 : i32 to vector<1x128xi32>
        %127 = arith.cmpi eq, %21, %126 : vector<1x128xi32>
        %c0_72 = arith.constant 0 : index
        %c0_73 = arith.constant 0 : index
        %128 = vector.load %arg7[%c0_72, %c0_73] : memref<8x128xf32, #tpu.memory_space<vmem>>, vector<8x128xf32>
        %129 = vector.shape_cast %127 : vector<1x128xi1> to vector<1x128xi1>
        %130 = vector.broadcast %129 : vector<1x128xi1> to vector<8x128xi1>
        %131 = vector.shape_cast %66 : vector<8x1xf32> to vector<8x1xf32>
        %132 = vector.broadcast %131 : vector<8x1xf32> to vector<8x128xf32>
        %133 = arith.select %130, %132, %128 : vector<8x128xi1>, vector<8x128xf32>
        %c0_74 = arith.constant 0 : index
        %c0_75 = arith.constant 0 : index
        %134 = vector.load %arg7[%c0_74, %c0_75] : memref<8x128xf32, #tpu.memory_space<vmem>>, vector<8x128xf32>
        tpu.vector_store %arg7[%c0_74, %c0_75], %133 {strides = array<i32>} : memref<8x128xf32, #tpu.memory_space<vmem>>, vector<8x128xf32>,
        %c0_76 = arith.constant 0 : index
        %c0_77 = arith.constant 0 : index
        %135 = vector.load %arg8[%c0_76, %c0_77] : memref<8x128xi32, #tpu.memory_space<vmem>>, vector<8x128xi32>
        %136 = vector.shape_cast %127 : vector<1x128xi1> to vector<1x128xi1>
        %137 = vector.broadcast %136 : vector<1x128xi1> to vector<8x128xi1>
        %138 = vector.shape_cast %74 : vector<8x1xi32> to vector<8x1xi32>
        %139 = vector.broadcast %138 : vector<8x1xi32> to vector<8x128xi32>
        %140 = arith.select %137, %139, %135 : vector<8x128xi1>, vector<8x128xi32>
        %c0_78 = arith.constant 0 : index
        %c0_79 = arith.constant 0 : index
        %141 = vector.load %arg8[%c0_78, %c0_79] : memref<8x128xi32, #tpu.memory_space<vmem>>, vector<8x128xi32>
        tpu.vector_store %arg8[%c0_78, %c0_79], %140 {strides = array<i32>} : memref<8x128xi32, #tpu.memory_space<vmem>>, vector<8x128xi32>,
        %142 = vector.shape_cast %124 : vector<8x128xf32> to vector<1x8x128xf32>
        %cst_80 = arith.constant dense<0xFF800000> : vector<1xf32>
        %143 = vector.multi_reduction <maximumf>, %142, %cst_80 [1, 2] : vector<1x8x128xf32> to vector<1xf32>
        %144 = vector.shape_cast %143 : vector<1xf32> to vector<1x1x1xf32>
        %145 = vector.extract %144[0, 0, 0] : f32 from vector<1x1x1xf32>
        %cst_81 = arith.constant -5.000000e+29 : f32
        %146 = arith.cmpf ogt, %145, %cst_81 : f32
        %147 = arith.extui %146 : i1 to i32
        %c0_82 = arith.constant 0 : index
        %148 = memref.load %arg9[%c0_82] : memref<1xi32, #tpu.memory_space<smem>>
        memref.store %147, %arg9[%c0_82] : memref<1xi32, #tpu.memory_space<smem>>
      } else {
      }
    }
    %c8_i32_25 = arith.constant 8 : i32
    %c0_26 = arith.constant 0 : index
    %c0_27 = arith.constant 0 : index
    %37 = vector.load %arg7[%c0_26, %c0_27] : memref<8x128xf32, #tpu.memory_space<vmem>>, vector<8x128xf32>
    %38 = vector.extract_strided_slice %37 {offsets = [0, 0], sizes = [8, 1], strides = [1, 1]} : vector<8x128xf32> to vector<8x1xf32>
    %c0_i32_28 = arith.constant 0 : i32
    %39 = vector.broadcast %c0_i32_28 : i32 to vector<8x1xi32>
    %cst_29 = arith.constant -1.000000e+00 : f32
    %40 = vector.broadcast %cst_29 : f32 to vector<1x128xf32>
    %c-1_i32 = arith.constant -1 : i32
    %41 = vector.broadcast %c-1_i32 : i32 to vector<1x128xi32>
    %cst_30 = arith.constant 0.000000e+00 : f32
    %42 = vector.broadcast %cst_30 : f32 to vector<1x128xf32>
    %cst_31 = arith.constant 0.000000e+00 : f32
    %43 = vector.broadcast %cst_31 : f32 to vector<1x128xf32>
    %cst_32 = arith.constant 0.000000e+00 : f32
    %44 = vector.broadcast %cst_32 : f32 to vector<1x128xf32>
    %cst_33 = arith.constant 0.000000e+00 : f32
    %45 = vector.broadcast %cst_33 : f32 to vector<1x128xf32>
    %c0_i32_34 = arith.constant 0 : i32
    %c8_i32_35 = arith.constant 8 : i32
    %46 = arith.addi %c0_i32_34, %c8_i32_35 : i32
    %c1_i32_36 = arith.constant 1 : i32
    %47:8 = scf.for %arg10 = %c0_i32_34 to %46 step %c1_i32_36 iter_args(%arg11 = %38, %arg12 = %39, %arg13 = %40, %arg14 = %41, %arg15 = %42, %arg16 = %43, %arg17 = %44, %arg18 = %45) -> (vector<8x1xf32>, vector<8x1xi32>, vector<1x128xf32>, vector<1x128xi32>, vector<1x128xf32>, vector<1x128xf32>, vector<1x128xf32>, vector<1x128xf32>)  : i32 {
      %58 = vector.shape_cast %arg11 : vector<8x1xf32> to vector<1x8x1xf32>
      %cst_47 = arith.constant dense<0xFF800000> : vector<1xf32>
      %59 = vector.multi_reduction <maximumf>, %58, %cst_47 [1, 2] : vector<1x8x1xf32> to vector<1xf32>
      %60 = vector.shape_cast %59 : vector<1xf32> to vector<1x1x1xf32>
      %61 = vector.extract %60[0, 0, 0] : f32 from vector<1x1x1xf32>
      %cst_48 = arith.constant -5.000000e+29 : f32
      %62 = arith.cmpf ogt, %61, %cst_48 : f32
      %63 = vector.broadcast %61 : f32 to vector<8x1xf32>
      %64 = arith.cmpf oeq, %arg11, %63 : vector<8x1xf32>
      %c8_i32_49 = arith.constant 8 : i32
      %65 = vector.broadcast %c8_i32_49 : i32 to vector<8x1xi32>
      %66 = arith.select %64, %22, %65 : vector<8x1xi1>, vector<8x1xi32>
      %67 = vector.shape_cast %66 : vector<8x1xi32> to vector<1x8x1xi32>
      %cst_50 = arith.constant dense<2147483647> : vector<1xi32>
      %68 = vector.multi_reduction <minsi>, %67, %cst_50 [1, 2] : vector<1x8x1xi32> to vector<1xi32>
      %69 = vector.shape_cast %68 : vector<1xi32> to vector<1x1x1xi32>
      %70 = vector.extract %69[0, 0, 0] : i32 from vector<1x1x1xi32>
      %71 = vector.broadcast %70 : i32 to vector<8x1xi32>
      %72 = arith.cmpi eq, %22, %71 : vector<8x1xi32>
      %c0_i32_51 = arith.constant 0 : i32
      %73 = vector.broadcast %c0_i32_51 : i32 to vector<8x1xi32>
      %74 = arith.select %72, %arg12, %73 : vector<8x1xi1>, vector<8x1xi32>
      %75 = vector.shape_cast %74 : vector<8x1xi32> to vector<1x8x1xi32>
      %cst_52 = arith.constant dense<0> : vector<1xi32>
      %76 = vector.multi_reduction <add>, %75, %cst_52 [1, 2] : vector<1x8x1xi32> to vector<1xi32>
      %77 = vector.shape_cast %76 : vector<1xi32> to vector<1x1x1xi32>
      %78 = vector.extract %77[0, 0, 0] : i32 from vector<1x1x1xi32>
      %79 = arith.index_cast %70 : i32 to index
      %c0_53 = arith.constant 0 : index
      %80 = vector.load %arg8[%79, %c0_53] : memref<8x128xi32, #tpu.memory_space<vmem>>, vector<1x128xi32>
      %81 = vector.broadcast %78 : i32 to vector<1x128xi32>
      %82 = arith.cmpi eq, %21, %81 : vector<1x128xi32>
      %c0_i32_54 = arith.constant 0 : i32
      %83 = vector.broadcast %c0_i32_54 : i32 to vector<1x128xi32>
      %84 = arith.select %82, %80, %83 : vector<1x128xi1>, vector<1x128xi32>
      %85 = vector.shape_cast %84 : vector<1x128xi32> to vector<1x1x128xi32>
      %cst_55 = arith.constant dense<0> : vector<1xi32>
      %86 = vector.multi_reduction <add>, %85, %cst_55 [1, 2] : vector<1x1x128xi32> to vector<1xi32>
      %87 = vector.shape_cast %86 : vector<1xi32> to vector<1x1x1xi32>
      %88 = vector.extract %87[0, 0, 0] : i32 from vector<1x1x1xi32>
      %c0_i32_56 = arith.constant 0 : i32
      %89 = arith.addi %c0_i32_56, %70 : i32
      %c0_57 = arith.constant 0 : index
      %90 = arith.index_cast %89 : i32 to index
      %c0_58 = arith.constant 0 : index
      %91 = vector.load %arg2[%c0_57, %90, %c0_58] : memref<1x32x128xf32, #tpu.memory_space<vmem>>, vector<1x1x128xf32>
      %92 = vector.shape_cast %91 : vector<1x1x128xf32> to vector<1x128xf32>
      %93 = vector.broadcast %88 : i32 to vector<1x128xi32>
      %94 = arith.cmpi eq, %21, %93 : vector<1x128xi32>
      %cst_59 = arith.constant 0.000000e+00 : f32
      %95 = vector.broadcast %cst_59 : f32 to vector<1x128xf32>
      %96 = arith.select %94, %92, %95 : vector<1x128xi1>, vector<1x128xf32>
      %97 = vector.shape_cast %96 : vector<1x128xf32> to vector<1x1x128xf32>
      %cst_60 = arith.constant dense<0.000000e+00> : vector<1xf32>
      %98 = vector.multi_reduction <add>, %97, %cst_60 [1, 2] : vector<1x1x128xf32> to vector<1xf32>
      %99 = vector.shape_cast %98 : vector<1xf32> to vector<1x1x1xf32>
      %100 = vector.extract %99[0, 0, 0] : f32 from vector<1x1x1xf32>
      %c8_i32_61 = arith.constant 8 : i32
      %101 = arith.addi %c8_i32_61, %70 : i32
      %c0_62 = arith.constant 0 : index
      %102 = arith.index_cast %101 : i32 to index
      %c0_63 = arith.constant 0 : index
      %103 = vector.load %arg2[%c0_62, %102, %c0_63] : memref<1x32x128xf32, #tpu.memory_space<vmem>>, vector<1x1x128xf32>
      %104 = vector.shape_cast %103 : vector<1x1x128xf32> to vector<1x128xf32>
      %105 = vector.broadcast %88 : i32 to vector<1x128xi32>
      %106 = arith.cmpi eq, %21, %105 : vector<1x128xi32>
      %cst_64 = arith.constant 0.000000e+00 : f32
      %107 = vector.broadcast %cst_64 : f32 to vector<1x128xf32>
      %108 = arith.select %106, %104, %107 : vector<1x128xi1>, vector<1x128xf32>
      %109 = vector.shape_cast %108 : vector<1x128xf32> to vector<1x1x128xf32>
      %cst_65 = arith.constant dense<0.000000e+00> : vector<1xf32>
      %110 = vector.multi_reduction <add>, %109, %cst_65 [1, 2] : vector<1x1x128xf32> to vector<1xf32>
      %111 = vector.shape_cast %110 : vector<1xf32> to vector<1x1x1xf32>
      %112 = vector.extract %111[0, 0, 0] : f32 from vector<1x1x1xf32>
      %c16_i32 = arith.constant 16 : i32
      %113 = arith.addi %c16_i32, %70 : i32
      %c0_66 = arith.constant 0 : index
      %114 = arith.index_cast %113 : i32 to index
      %c0_67 = arith.constant 0 : index
      %115 = vector.load %arg2[%c0_66, %114, %c0_67] : memref<1x32x128xf32, #tpu.memory_space<vmem>>, vector<1x1x128xf32>
      %116 = vector.shape_cast %115 : vector<1x1x128xf32> to vector<1x128xf32>
      %117 = vector.broadcast %88 : i32 to vector<1x128xi32>
      %118 = arith.cmpi eq, %21, %117 : vector<1x128xi32>
      %cst_68 = arith.constant 0.000000e+00 : f32
      %119 = vector.broadcast %cst_68 : f32 to vector<1x128xf32>
      %120 = arith.select %118, %116, %119 : vector<1x128xi1>, vector<1x128xf32>
      %121 = vector.shape_cast %120 : vector<1x128xf32> to vector<1x1x128xf32>
      %cst_69 = arith.constant dense<0.000000e+00> : vector<1xf32>
      %122 = vector.multi_reduction <add>, %121, %cst_69 [1, 2] : vector<1x1x128xf32> to vector<1xf32>
      %123 = vector.shape_cast %122 : vector<1xf32> to vector<1x1x1xf32>
      %124 = vector.extract %123[0, 0, 0] : f32 from vector<1x1x1xf32>
      %c24_i32 = arith.constant 24 : i32
      %125 = arith.addi %c24_i32, %70 : i32
      %c0_70 = arith.constant 0 : index
      %126 = arith.index_cast %125 : i32 to index
      %c0_71 = arith.constant 0 : index
      %127 = vector.load %arg2[%c0_70, %126, %c0_71] : memref<1x32x128xf32, #tpu.memory_space<vmem>>, vector<1x1x128xf32>
      %128 = vector.shape_cast %127 : vector<1x1x128xf32> to vector<1x128xf32>
      %129 = vector.broadcast %88 : i32 to vector<1x128xi32>
      %130 = arith.cmpi eq, %21, %129 : vector<1x128xi32>
      %cst_72 = arith.constant 0.000000e+00 : f32
      %131 = vector.broadcast %cst_72 : f32 to vector<1x128xf32>
      %132 = arith.select %130, %128, %131 : vector<1x128xi1>, vector<1x128xf32>
      %133 = vector.shape_cast %132 : vector<1x128xf32> to vector<1x1x128xf32>
      %cst_73 = arith.constant dense<0.000000e+00> : vector<1xf32>
      %134 = vector.multi_reduction <add>, %133, %cst_73 [1, 2] : vector<1x1x128xf32> to vector<1xf32>
      %135 = vector.shape_cast %134 : vector<1xf32> to vector<1x1x1xf32>
      %136 = vector.extract %135[0, 0, 0] : f32 from vector<1x1x1xf32>
      %137 = vector.broadcast %arg10 : i32 to vector<1x128xi32>
      %138 = arith.cmpi eq, %23, %137 : vector<1x128xi32>
      %cst_74 = arith.constant -1.000000e+00 : f32
      %139 = arith.select %62, %61, %cst_74 : f32
      %140 = vector.broadcast %139 : f32 to vector<1x128xf32>
      %141 = arith.select %138, %140, %arg13 : vector<1x128xi1>, vector<1x128xf32>
      %c-1_i32_75 = arith.constant -1 : i32
      %142 = arith.select %62, %70, %c-1_i32_75 : i32
      %143 = vector.broadcast %142 : i32 to vector<1x128xi32>
      %144 = arith.select %138, %143, %arg14 : vector<1x128xi1>, vector<1x128xi32>
      %145 = vector.broadcast %62 : i1 to vector<1x128xi1>
      %146 = arith.andi %138, %145 : vector<1x128xi1>
      %147 = vector.broadcast %100 : f32 to vector<1x128xf32>
      %148 = arith.select %146, %147, %arg15 : vector<1x128xi1>, vector<1x128xf32>
      %149 = vector.broadcast %112 : f32 to vector<1x128xf32>
      %150 = arith.select %146, %149, %arg16 : vector<1x128xi1>, vector<1x128xf32>
      %151 = vector.broadcast %124 : f32 to vector<1x128xf32>
      %152 = arith.select %146, %151, %arg17 : vector<1x128xi1>, vector<1x128xf32>
      %153 = vector.broadcast %136 : f32 to vector<1x128xf32>
      %154 = arith.select %146, %153, %arg18 : vector<1x128xi1>, vector<1x128xf32>
      %c1_i32_76 = arith.constant 1 : i32
      %155 = arith.addi %78, %c1_i32_76 : i32
      %156 = arith.index_cast %70 : i32 to index
      %c0_77 = arith.constant 0 : index
      %157 = vector.load %arg7[%156, %c0_77] : memref<8x128xf32, #tpu.memory_space<vmem>>, vector<1x128xf32>
      %158 = vector.broadcast %155 : i32 to vector<1x128xi32>
      %159 = arith.cmpi eq, %21, %158 : vector<1x128xi32>
      %cst_78 = arith.constant -1.000000e+30 : f32
      %160 = vector.broadcast %cst_78 : f32 to vector<1x128xf32>
      %161 = arith.select %159, %157, %160 : vector<1x128xi1>, vector<1x128xf32>
      %162 = vector.shape_cast %161 : vector<1x128xf32> to vector<1x1x128xf32>
      %cst_79 = arith.constant dense<0xFF800000> : vector<1xf32>
      %163 = vector.multi_reduction <maximumf>, %162, %cst_79 [1, 2] : vector<1x1x128xf32> to vector<1xf32>
      %164 = vector.shape_cast %163 : vector<1xf32> to vector<1x1x1xf32>
      %165 = vector.extract %164[0, 0, 0] : f32 from vector<1x1x1xf32>
      %166 = vector.broadcast %70 : i32 to vector<8x1xi32>
      %167 = arith.cmpi eq, %22, %166 : vector<8x1xi32>
      %168 = vector.broadcast %62 : i1 to vector<8x1xi1>
      %169 = arith.andi %167, %168 : vector<8x1xi1>
      %170 = vector.broadcast %165 : f32 to vector<8x1xf32>
      %171 = arith.select %169, %170, %arg11 : vector<8x1xi1>, vector<8x1xf32>
      %172 = vector.broadcast %155 : i32 to vector<8x1xi32>
      %173 = arith.select %169, %172, %arg12 : vector<8x1xi1>, vector<8x1xi32>
      scf.yield %171, %173, %141, %144, %148, %150, %152, %154 : vector<8x1xf32>, vector<8x1xi32>, vector<1x128xf32>, vector<1x128xi32>, vector<1x128xf32>, vector<1x128xf32>, vector<1x128xf32>, vector<1x128xf32>
    }
    %c8_i32_37 = arith.constant 8 : i32
    %48 = tpu.concatenate %47#4, %47#5, %47#6, %47#7 in 0 : vector<1x128xf32>, vector<1x128xf32>, vector<1x128xf32>, vector<1x128xf32> -> vector<4x128xf32>
    %c0_38 = arith.constant 0 : index
    %c0_39 = arith.constant 0 : index
    %c0_40 = arith.constant 0 : index
    %49 = vector.load %arg3[%c0_38, %c0_39, %c0_40] : memref<1x4x128xf32, #tpu.memory_space<vmem>>, vector<1x4x128xf32>
    %50 = vector.shape_cast %49 : vector<1x4x128xf32> to vector<4x128xf32>
    %51 = vector.shape_cast %48 : vector<4x128xf32> to vector<1x4x128xf32>
    tpu.vector_store %arg3[%c0_38, %c0_39, %c0_40], %51 {strides = array<i32>} : memref<1x4x128xf32, #tpu.memory_space<vmem>>, vector<1x4x128xf32>,
    %c0_41 = arith.constant 0 : index
    %c0_42 = arith.constant 0 : index
    %c0_43 = arith.constant 0 : index
    %52 = vector.load %arg4[%c0_41, %c0_42, %c0_43] : memref<1x1x128xf32, #tpu.memory_space<vmem>>, vector<1x1x128xf32>
    %53 = vector.shape_cast %52 : vector<1x1x128xf32> to vector<1x128xf32>
    %54 = vector.shape_cast %47#2 : vector<1x128xf32> to vector<1x1x128xf32>
    tpu.vector_store %arg4[%c0_41, %c0_42, %c0_43], %54 {strides = array<i32>} : memref<1x1x128xf32, #tpu.memory_space<vmem>>, vector<1x1x128xf32>,
    %c0_44 = arith.constant 0 : index
    %c0_45 = arith.constant 0 : index
    %c0_46 = arith.constant 0 : index
    %55 = vector.load %arg5[%c0_44, %c0_45, %c0_46] : memref<1x1x128xi32, #tpu.memory_space<vmem>>, vector<1x1x128xi32>
    %56 = vector.shape_cast %55 : vector<1x1x128xi32> to vector<1x128xi32>
    %57 = vector.shape_cast %47#3 : vector<1x128xi32> to vector<1x1x128xi32>
    tpu.vector_store %arg5[%c0_44, %c0_45, %c0_46], %57 {strides = array<i32>} : memref<1x1x128xi32, #tpu.memory_space<vmem>>, vector<1x1x128xi32>,
    return
  }
  func.func @transform_0(%arg0: i32) -> (i32, i32, i32) {
    %c0_i32 = arith.constant 0 : i32
    %c0_i32_0 = arith.constant 0 : i32
    %c0_i32_1 = arith.constant 0 : i32
    return %arg0, %c0_i32, %c0_i32_0 : i32, i32, i32
  }
  func.func @transform_1(%arg0: i32) -> (i32, i32, i32) {
    %c0_i32 = arith.constant 0 : i32
    %c0_i32_0 = arith.constant 0 : i32
    %c0_i32_1 = arith.constant 0 : i32
    return %arg0, %c0_i32, %c0_i32_0 : i32, i32, i32
  }
  func.func @transform_2(%arg0: i32) -> (i32, i32, i32) {
    %c0_i32 = arith.constant 0 : i32
    %c0_i32_0 = arith.constant 0 : i32
    %c0_i32_1 = arith.constant 0 : i32
    return %arg0, %c0_i32, %c0_i32_0 : i32, i32, i32
  }
  func.func @transform_3(%arg0: i32) -> (i32, i32, i32) {
    %c0_i32 = arith.constant 0 : i32
    %c0_i32_0 = arith.constant 0 : i32
    %c0_i32_1 = arith.constant 0 : i32
    return %arg0, %c0_i32, %c0_i32_0 : i32, i32, i32
  }
  func.func @transform_4(%arg0: i32) -> (i32, i32, i32) {
    %c0_i32 = arith.constant 0 : i32
    %c0_i32_0 = arith.constant 0 : i32
    %c0_i32_1 = arith.constant 0 : i32
    return %arg0, %c0_i32, %c0_i32_0 : i32, i32, i32
  }
}

</mosaic_0001>

<llo_original>
// kernel: tpu_custom_call.1
$region0: #{tpu_custom_call.1}
  #allocation0 [shape = 'u32[]', space=smem, size = 0x4, offset = 0x4, fixed_abs, tag = 'smem constant byte address 0x4 - core index']
  #allocation1 [shape = 'u32[144,128]{1,0:T(1,128)}', space=vmem, size = 0x12000, scoped, tag = 'internal scratch']
  #allocation2 [shape = 'f32[8,128]{1,0:T(8,128)}', space=vmem, size = 0x1000, scoped, tag = 'scratch operand']
  #allocation3 [shape = 'f32[8,128]{1,0:T(8,128)}', space=vmem, size = 0x1000, scoped, tag = 'scratch operand']
  #allocation4 [shape = 's32[8,128]{1,0:T(8,128)}', space=vmem, size = 0x1000, scoped, tag = 'scratch operand']
  #allocation5 [shape = 's32[1]{0:T(128)}', space=smem, size = 0x200, scoped, tag = 'scratch operand']
  %s0 = inlined_call_operand.hbm [shape: f32[2,8,128], index: 0, kind: input, shape index: {}]
  %s1 = inlined_call_operand.hbm [shape: f32[2,32,128], index: 1, kind: input, shape index: {}]
  %s2 = inlined_call_operand.hbm [shape: f32[2,4,128], index: 2, kind: output, shape index: {0}]
  %s3 = inlined_call_operand.hbm [shape: f32[2,1,128], index: 3, kind: output, shape index: {1}]
  %s4 = inlined_call_operand.hbm [shape: s32[2,1,128], index: 4, kind: output, shape index: {2}]
  %5 = xla_tuple %s2, %s3, %s4
  %s6 = sld [smem:[#allocation0]]
  $region83: #{tpu_custom_call.1} parent=0
    _
  %s8 = ssub.s32 1, %s6
  %s9 = scalar_select 0, %s8, %s6
  $region1: #{tpu_custom_call.1} parent=0
    #allocation6 [shape = 'u8[8192]{0}', space=vmem, size = 0x2000, scoped, tag = 'input window, operand 0']
    #allocation7 [shape = 's32[2]{0}', space=sflag, size = 0x8, scoped, tag = 'scoped memory for tpu_custom_call.1']
    #allocation8 [shape = 's32[2]{0}', space=sflag, size = 0x8, scoped, tag = 'scoped memory for tpu_custom_call.1']
    #allocation9 [shape = 'u8[32768]{0}', space=vmem, size = 0x8000, scoped, tag = 'input window, operand 1']
    #allocation10 [shape = 's32[2]{0}', space=sflag, size = 0x8, scoped, tag = 'scoped memory for tpu_custom_call.1']
    #allocation11 [shape = 'u8[4096]{0}', space=vmem, size = 0x1000, scoped, tag = 'output window, operand 0']
    #allocation12 [shape = 'u8[1024]{0}', space=vmem, size = 0x400, scoped, tag = 'output window, operand 1']
    #allocation13 [shape = 's32[2]{0}', space=sflag, size = 0x8, scoped, tag = 'scoped memory for tpu_custom_call.1']
    #allocation14 [shape = 'u8[1024]{0}', space=vmem, size = 0x400, scoped, tag = 'output window, operand 2']
    %10 = vsyncpa [#allocation7], 0
    %s11 = scalar_lea.sflag [#allocation7], 1
    %12 = vsyncpa %s11, 0
    %13 = vsyncpa [#allocation10], 0
    %s14 = scalar_lea.sflag [#allocation10], 1
    %15 = vsyncpa %s14, 0
    %16 = vsyncpa [#allocation8], 0
    %s17 = scalar_lea.sflag [#allocation8], 1
    %18 = vsyncpa %s17, 0
    %19 = vsyncpa [#allocation13], 0
    %s20 = scalar_lea.sflag [#allocation13], 1
    %21 = vsyncpa %s20, 0
    loop: start=0, step=1, limit=4
    $region2: #{tpu_custom_call.1} parent=1 // loop_pre_header
      _
    $region3: #{tpu_custom_call.1} parent=1 // loop_header
      %s23 = sphi 0, %s27
      %p24 = scmp.ge.s32.totalorder %s23, 4
      %s33 = sphi 0, %s35
      %s36 = sphi 0, %s33
      %s37 = sphi 0, %s36
      %s53 = sphi 0, %s37
      %s59 = sphi 0, %s61
      %s62 = sphi 0, %s59
      %s63 = sphi 0, %s62
      %s79 = sphi 0, %s63
      %s85 = sphi 0, %s87
      %s88 = sphi 0, %s85
      %s89 = sphi 0, %s88
      %s105 = sphi 0, %s89
      %s111 = sphi 0, %s113
      %s114 = sphi 0, %s111
      %s115 = sphi 0, %s114
      %s131 = sphi 0, %s115
      %s137 = sphi 0, %s139
      %s140 = sphi 0, %s137
      %s141 = sphi 0, %s140
      %s157 = sphi 0, %s141
    $region4: #{tpu_custom_call.1} parent=1 // loop_header_branch
      %26 = sbr.rel (%p24) target = $region8
    $region5: #{tpu_custom_call.1} parent=1 // loop_body
      %s28 = ssub.s32 %s23, 1
      %s29 = ssub.s32 %s23, 2
      %s30 = sadd.s32 %s23, 1
      %s31 = ssub.s32 %s23, %s30
      %p32 = scmp.eq.s32.totalorder %s31, 0
      %s34 = sadd.s32 %s33, 1
      %s35 = scalar_select %p32, %s33, %s34
      %p38 = pneg %p32
      %p39 = scmp.eq.s32.totalorder %s23, 1
      %p40 = por %p38, %p39
      %p41 = scmp.ne.s32.totalorder %s33, %s36
      %p42 = scmp.eq.s32.totalorder %s23, 0
      %p43 = por %p41, %p42
      %p44 = scmp.ne.s32.totalorder %s33, %s36
      %p45 = scmp.eq.s32.totalorder %s28, 1
      %p46 = por %p44, %p45
      %p47 = scmp.ne.s32.totalorder %s36, %s37
      %p48 = scmp.eq.s32.totalorder %s28, 0
      %p49 = por %p47, %p48
      %p50 = scmp.ne.s32.totalorder %s36, %s37
      %p51 = scmp.eq.s32.totalorder %s29, 1
      %p52 = por %p50, %p51
      %p54 = scmp.ne.s32.totalorder %s37, %s53
      %p55 = scmp.eq.s32.totalorder %s29, 0
      %p56 = por %p54, %p55
      %s57 = ssub.s32 %s23, %s30
      %p58 = scmp.eq.s32.totalorder %s57, 0
      %s60 = sadd.s32 %s59, 1
      %s61 = scalar_select %p58, %s59, %s60
      %p64 = pneg %p58
      %p65 = scmp.eq.s32.totalorder %s23, 1
      %p66 = por %p64, %p65
      %p67 = scmp.ne.s32.totalorder %s59, %s62
      %p68 = scmp.eq.s32.totalorder %s23, 0
      %p69 = por %p67, %p68
      %p70 = scmp.ne.s32.totalorder %s59, %s62
      %p71 = scmp.eq.s32.totalorder %s28, 1
      %p72 = por %p70, %p71
      %p73 = scmp.ne.s32.totalorder %s62, %s63
      %p74 = scmp.eq.s32.totalorder %s28, 0
      %p75 = por %p73, %p74
      %p76 = scmp.ne.s32.totalorder %s62, %s63
      %p77 = scmp.eq.s32.totalorder %s29, 1
      %p78 = por %p76, %p77
      %p80 = scmp.ne.s32.totalorder %s63, %s79
      %p81 = scmp.eq.s32.totalorder %s29, 0
      %p82 = por %p80, %p81
      %s83 = ssub.s32 %s23, %s30
      %p84 = scmp.eq.s32.totalorder %s83, 0
      %s86 = sadd.s32 %s85, 1
      %s87 = scalar_select %p84, %s85, %s86
      %p90 = pneg %p84
      %p91 = scmp.eq.s32.totalorder %s23, 1
      %p92 = por %p90, %p91
      %p93 = scmp.ne.s32.totalorder %s85, %s88
      %p94 = scmp.eq.s32.totalorder %s23, 0
      %p95 = por %p93, %p94
      %p96 = scmp.ne.s32.totalorder %s85, %s88
      %p97 = scmp.eq.s32.totalorder %s28, 1
      %p98 = por %p96, %p97
      %p99 = scmp.ne.s32.totalorder %s88, %s89
      %p100 = scmp.eq.s32.totalorder %s28, 0
      %p101 = por %p99, %p100
      %p102 = scmp.ne.s32.totalorder %s88, %s89
      %p103 = scmp.eq.s32.totalorder %s29, 1
      %p104 = por %p102, %p103
      %p106 = scmp.ne.s32.totalorder %s89, %s105
      %p107 = scmp.eq.s32.totalorder %s29, 0
      %p108 = por %p106, %p107
      %s109 = ssub.s32 %s23, %s30
      %p110 = scmp.eq.s32.totalorder %s109, 0
      %s112 = sadd.s32 %s111, 1
      %s113 = scalar_select %p110, %s111, %s112
      %p116 = pneg %p110
      %p117 = scmp.eq.s32.totalorder %s23, 1
      %p118 = por %p116, %p117
      %p119 = scmp.ne.s32.totalorder %s111, %s114
      %p120 = scmp.eq.s32.totalorder %s23, 0
      %p121 = por %p119, %p120
      %p122 = scmp.ne.s32.totalorder %s111, %s114
      %p123 = scmp.eq.s32.totalorder %s28, 1
      %p124 = por %p122, %p123
      %p125 = scmp.ne.s32.totalorder %s114, %s115
      %p126 = scmp.eq.s32.totalorder %s28, 0
      %p127 = por %p125, %p126
      %p128 = scmp.ne.s32.totalorder %s114, %s115
      %p129 = scmp.eq.s32.totalorder %s29, 1
      %p130 = por %p128, %p129
      %p132 = scmp.ne.s32.totalorder %s115, %s131
      %p133 = scmp.eq.s32.totalorder %s29, 0
      %p134 = por %p132, %p133
      %s135 = ssub.s32 %s23, %s30
      %p136 = scmp.eq.s32.totalorder %s135, 0
      %s138 = sadd.s32 %s137, 1
      %s139 = scalar_select %p136, %s137, %s138
      %p142 = pneg %p136
      %p143 = scmp.eq.s32.totalorder %s23, 1
      %p144 = por %p142, %p143
      %p145 = scmp.ne.s32.totalorder %s137, %s140
      %p146 = scmp.eq.s32.totalorder %s23, 0
      %p147 = por %p145, %p146
      %p148 = scmp.ne.s32.totalorder %s137, %s140
      %p149 = scmp.eq.s32.totalorder %s28, 1
      %p150 = por %p148, %p149
      %p151 = scmp.ne.s32.totalorder %s140, %s141
      %p152 = scmp.eq.s32.totalorder %s28, 0
      %p153 = por %p151, %p152
      %p154 = scmp.ne.s32.totalorder %s140, %s141
      %p155 = scmp.eq.s32.totalorder %s29, 1
      %p156 = por %p154, %p155
      %p158 = scmp.ne.s32.totalorder %s141, %s157
      %p159 = scmp.eq.s32.totalorder %s29, 0
      %p160 = por %p158, %p159
      %p161 = scmp.le.s32.totalorder 1, %s23
      %p162 = scmp.lt.s32.totalorder %s23, 3
      %p163 = pnand %p161, %p162
      %p164 = pneg %p163
      // Predicated region
      $region9: #{tpu_custom_call.1} parent=5 // pred_check
        _
      $region10: #{tpu_custom_call.1} parent=5 // pred_check_branch
        %166 = sbr.rel (%p163) target = $region12
      $region11: #{tpu_custom_call.1} parent=5 // pred_region
        %s167 = ssub.s32 %s23, 1
      $region12: #{tpu_custom_call.1} parent=5 // pred_fallthru
        _
      %p168 = scmp.lt.s32.totalorder %s23, 2
      // Predicated region
      $region13: #{tpu_custom_call.1} parent=5 // pred_check
        %p169 = pneg %p168
      $region14: #{tpu_custom_call.1} parent=5 // pred_check_branch
        %171 = sbr.rel (%p169) target = $region16
      $region15: #{tpu_custom_call.1} parent=5 // pred_region
        // Predicated region
        $region17: #{tpu_custom_call.1} parent=15 // pred_check
          %p172 = pneg %p43
        $region18: #{tpu_custom_call.1} parent=15 // pred_check_branch
          %174 = sbr.rel (%p172) target = $region20
        $region19: #{tpu_custom_call.1} parent=15 // pred_region
          %s175 = sand.u32 %s33, 1
          %s176 = scalar_lea.sflag [#allocation7], %s175
          %s177 = sand.u32 %s33, 1
          %s178 = smul.addr %s177, 8
          %s179 = scalar_lea.vmem [#allocation6], %s178
          %s181 = ssub.s32 128, 128
          %182 = vsyncadd %s176, %s181
          %s183 = smul.addr %s23, 128
          %s184 = scalar_lea.hbm %s0, %s183
          %s186 = sshll.u32 %s179, 4
          %s187 = int_to_ptr.vmem [resolvable:$true] %s186
          %189 = dma.hbm_to_vmem [thread:$0]  %s184, 128, %s187, %s176
        $region20: #{tpu_custom_call.1} parent=15 // pred_fallthru
          _
        // Predicated region
        $region21: #{tpu_custom_call.1} parent=15 // pred_check
          %p190 = pneg %p69
        $region22: #{tpu_custom_call.1} parent=15 // pred_check_branch
          %192 = sbr.rel (%p190) target = $region24
        $region23: #{tpu_custom_call.1} parent=15 // pred_region
          %s193 = sand.u32 %s59, 1
          %s194 = scalar_lea.sflag [#allocation10], %s193
          %s195 = sand.u32 %s59, 1
          %s196 = smul.addr %s195, 32
          %s197 = scalar_lea.vmem [#allocation9], %s196
          %s199 = ssub.s32 512, 512
          %200 = vsyncadd %s194, %s199
          %s201 = smul.addr %s23, 4
          %s202 = smul.addr %s201, 128
          %s203 = scalar_lea.hbm %s1, %s202
          %s204 = sshll.u32 %s197, 4
          %s205 = int_to_ptr.vmem [resolvable:$true] %s204
          %210 = dma.hbm_to_vmem [thread:$0]  %s203, 512, %s205, %s194, 128, 128, 8
        $region24: #{tpu_custom_call.1} parent=15 // pred_fallthru
          _
      $region16: #{tpu_custom_call.1} parent=5 // pred_fallthru
        _
      %p211 = scmp.le.s32.totalorder 1, %s23
      %p212 = scmp.lt.s32.totalorder %s23, 3
      %p213 = pnand %p211, %p212
      %p214 = pneg %p213
      // Predicated region
      $region25: #{tpu_custom_call.1} parent=5 // pred_check
        _
      $region26: #{tpu_custom_call.1} parent=5 // pred_check_branch
        %216 = sbr.rel (%p213) target = $region28
      $region27: #{tpu_custom_call.1} parent=5 // pred_region
        %s217 = ssub.s32 %s23, 1
        %s218 = sand.u32 %s36, 1
        %s219 = scalar_lea.sflag [#allocation7], %s218
        %s220 = sand.u32 %s36, 1
        %s221 = smul.addr %s220, 8
        %s222 = scalar_lea.vmem [#allocation6], %s221
        // Predicated region
        $region29: #{tpu_custom_call.1} parent=27 // pred_check
          %p223 = pneg %p49
        $region30: #{tpu_custom_call.1} parent=27 // pred_check_branch
          %225 = sbr.rel (%p223) target = $region32
        $region31: #{tpu_custom_call.1} parent=27 // pred_region
          %226 = dma.done %s219, 128
        $region32: #{tpu_custom_call.1} parent=27 // pred_fallthru
          _
        %s227 = sand.u32 %s62, 1
        %s228 = scalar_lea.sflag [#allocation10], %s227
        %s229 = sand.u32 %s62, 1
        %s230 = smul.addr %s229, 32
        %s231 = scalar_lea.vmem [#allocation9], %s230
        // Predicated region
        $region33: #{tpu_custom_call.1} parent=27 // pred_check
          %p232 = pneg %p75
        $region34: #{tpu_custom_call.1} parent=27 // pred_check_branch
          %234 = sbr.rel (%p232) target = $region36
        $region35: #{tpu_custom_call.1} parent=27 // pred_region
          %235 = dma.done %s228, 512
        $region36: #{tpu_custom_call.1} parent=27 // pred_fallthru
          _
        %s236 = sand.u32 %s36, 1
        %s237 = scalar_lea.sflag [#allocation7], %s236
        %s238 = sand.u32 %s36, 1
        %s239 = smul.addr %s238, 8
        %s240 = scalar_lea.vmem [#allocation6], %s239
        %p241 = pneg %p49
        %p242 = pneg %p46
        %s243 = sand.u32 %s62, 1
        %s244 = scalar_lea.sflag [#allocation10], %s243
        %s245 = sand.u32 %s62, 1
        %s246 = smul.addr %s245, 32
        %s247 = scalar_lea.vmem [#allocation9], %s246
        %p248 = pneg %p75
        %p249 = pneg %p72
        %p250 = pneg %p101
        %p251 = pneg %p98
        %s252 = sand.u32 %s88, 1
        %s253 = scalar_lea.sflag [#allocation8], %s252
        %s254 = sand.u32 %s88, 1
        %s255 = smul.addr %s254, 4
        %s256 = scalar_lea.vmem [#allocation11], %s255
        %p257 = pneg %p127
        %p258 = pneg %p124
        %s259 = sand.u32 %s28, 1
        %s260 = scalar_lea.sflag [#allocation13], %s259
        %s261 = sand.u32 %s114, 1
        %s262 = scalar_lea.vmem [#allocation12], %s261
        %p263 = pneg %p153
        %p264 = pneg %p150
        %s265 = sand.u32 %s28, 1
        %s266 = scalar_lea.sflag [#allocation13], %s265
        %s267 = sand.u32 %s140, 1
        %s268 = scalar_lea.vmem [#allocation14], %s267
        %v269 = vld [vmem:[%s231] sm:$0xff]
        %v270 = vld [vmem:[%s231 + $0x8] sm:$0xff]
        %v271 = vld [vmem:[%s231 + $0x10] sm:$0xff]
        %v272 = vld [vmem:[%s231 + $0x18] sm:$0xff]
        %v273 = vsub.f32 %v271, %v269
        %v274 = vmax.f32 %v273, 0.0
        %v275 = vsub.f32 %v272, %v270
        %v276 = vmax.f32 %v275, 0.0
        %v277 = vmul.f32 %v274, %v276
        %v278 = vld [vmem:[%s222] sm:$0xff]
        %vm279 = vcmp.gt.f32.partialorder %v278, 0.05
        %v280 = vsel %vm279, %v278, -1e+30
        %v281 = vlaneseq
        %v282 = vand.u32 %v281, 127
        %v283 = vlaneseq
        %v284 = vshrl.u32 %v283, 7
        %285 = vst [vmem:[#allocation2] sm:$0xff] %v280
        %286 = vst [vmem:[#allocation3] sm:$0xff] -1e+30
        %287 = vst [vmem:[#allocation4] sm:$0xff] 0
        %288 = vmax.xlane.f32.xlu0 %v280
        %v289 = vpop.xlane.xlu0 %288
        %v290 = vrot.slane %v289, 4
        %v291 = vmax.f32 %v289, %v290
        %v292 = vrot.slane %v291, 2
        %v293 = vmax.f32 %v291, %v292
        %v294 = vrot.slane %v293, 1
        %v295 = vmax.f32 %v293, %v294
        %s296 = vtos %v295
        %p297 = scmp.gt.f32.partialorder %s296, -5e+29
        %s298 = scalar_select %p297, 1, 0
        %s299 = scalar_lea.smem [#allocation5], 0
        %300 = sst [smem:[%s299]] %s298
        loop: start=0, step=1, limit=8
        $region37: #{tpu_custom_call.1} parent=27 // loop_pre_header
          _
        $region38: #{tpu_custom_call.1} parent=27 // loop_header
          %s302 = sphi 0, %s306
          %p303 = scmp.ge.s32.totalorder %s302, 8
        $region39: #{tpu_custom_call.1} parent=27 // loop_header_branch
          %305 = sbr.rel (%p303) target = $region43
        $region40: #{tpu_custom_call.1} parent=27 // loop_body
          %s307 = sld [smem:[#allocation5]]
          %p308 = scmp.eq.s32.totalorder %s307, 1
          // Predicated region
          $region44: #{tpu_custom_call.1} parent=40 // pred_check
            %p309 = pneg %p308
          $region45: #{tpu_custom_call.1} parent=40 // pred_check_branch
            %311 = sbr.rel (%p309) target = $region47
          $region46: #{tpu_custom_call.1} parent=40 // pred_region
            %v312 = vld [vmem:[#allocation2] sm:$0xff]
            %313 = vmax.xlane.f32.xlu0 %v312
            %v314 = vpop.xlane.xlu0 %313
            %vm315 = vcmp.eq.f32.partialorder %v312, %v314
            %v316 = vsel %vm315, %v282, 128
            %v317 = vand.u32 %v316, 65535
            %v318 = vshra.s32 %v316, 16
            %v319 = vcvt.s32.f32 %v317
            %v320 = vcvt.s32.f32 %v318
            %321 = vmin.xlane.f32.xlu0 %v320
            %v322 = vpop.xlane.xlu0 %321
            %vm323 = vcmp.eq.f32.partialorder %v320, %v322
            %v324 = vsel %vm323, %v319, inf
            %325 = vmin.xlane.f32.xlu0 %v324
            %v326 = vpop.xlane.xlu0 %325
            %v327 = vcvt.f32.s32 %v326
            %v328 = vcvt.f32.s32 %v322
            %v329 = vshll.u32 %v328, 16
            %v330 = vadd.s32 %v329, %v327
            %vm331 = vcmp.eq.s32.totalorder %v282, %v330
            %v332 = vsel %vm331, %v269, 0.0
            %333 = vadd.xlane.f32.xlu0 %v332
            %v334 = vpop.xlane.xlu0 %333
            %v335 = vsel %vm331, %v270, 0.0
            %336 = vadd.xlane.f32.xlu0 %v335
            %v337 = vpop.xlane.xlu0 %336
            %v338 = vsel %vm331, %v271, 0.0
            %339 = vadd.xlane.f32.xlu0 %v338
            %v340 = vpop.xlane.xlu0 %339
            %v341 = vsel %vm331, %v272, 0.0
            %342 = vadd.xlane.f32.xlu0 %v341
            %v343 = vpop.xlane.xlu0 %342
            %v344 = vsub.f32 %v340, %v334
            %v345 = vmax.f32 %v344, 0.0
            %v346 = vsub.f32 %v343, %v337
            %v347 = vmax.f32 %v346, 0.0
            %v348 = vmul.f32 %v345, %v347
            %v349 = vmax.f32 %v269, %v334
            %v350 = vmax.f32 %v270, %v337
            %v351 = vmin.f32 %v271, %v340
            %v352 = vmin.f32 %v272, %v343
            %v353 = vsub.f32 %v351, %v349
            %v354 = vmax.f32 %v353, 0.0
            %v355 = vsub.f32 %v352, %v350
            %v356 = vmax.f32 %v355, 0.0
            %v357 = vmul.f32 %v354, %v356
            %v358 = vadd.f32 %v277, %v348
            %v359 = vsub.f32 %v358, %v357
            %v360 = vmul.f32 %v359, 0.5
            %vm361 = vcmp.gt.f32.partialorder %v357, %v360
            %vm362 = vmor %vm361, %vm331
            %v363 = vsel %vm362, -1e+30, %v312
            %364 = vst [vmem:[#allocation2] sm:$0xff] %v363
            %v365 = vstv %s302
            %vm366 = vcmp.eq.s32.totalorder %v282, %v365
            %v367 = vld [vmem:[#allocation3] sm:$0xff]
            %v368 = vsel %vm366, 1, 0
            %vm369 = vcmp.eq.s32.totalorder %v368, 1
            %v370 = vsel %vm369, %v314, %v367
            %371 = vst [vmem:[#allocation3] sm:$0xff] %v370
            %v372 = vld [vmem:[#allocation4] sm:$0xff]
            %v373 = vsel %vm369, %v330, %v372
            %374 = vst [vmem:[#allocation4] sm:$0xff] %v373
            %375 = vmax.xlane.f32.xlu0 %v363
            %v376 = vpop.xlane.xlu0 %375
            %v377 = vrot.slane %v376, 4
            %v378 = vmax.f32 %v376, %v377
            %v379 = vrot.slane %v378, 2
            %v380 = vmax.f32 %v378, %v379
            %v381 = vrot.slane %v380, 1
            %v382 = vmax.f32 %v380, %v381
            %s383 = vtos %v382
            %p384 = scmp.gt.f32.partialorder %s383, -5e+29
            %s385 = scalar_select %p384, 1, 0
            %386 = sst [smem:[%s299]] %s385
          $region47: #{tpu_custom_call.1} parent=40 // pred_fallthru
            _
        $region41: #{tpu_custom_call.1} parent=27 // loop_footer
          %s306 = sadd.s32 1, %s302
        $region42: #{tpu_custom_call.1} parent=27 // loop_footer_branch
          %301 = sbr.rel target = $region38
        $region43: #{tpu_custom_call.1} parent=27 // loop_exit
          _
        %v387 = vld [vmem:[#allocation3] sm:$0xff]
        loop: start=0, step=1, limit=8
        $region48: #{tpu_custom_call.1} parent=27 // loop_pre_header
          _
        $region49: #{tpu_custom_call.1} parent=27 // loop_header
          %s389 = sphi 0, %s393
          %p390 = scmp.ge.s32.totalorder %s389, 8
          %v394 = vphi %v387, %v573
          %v395 = vphi 0, %v574
          %v396 = vphi -1.0, %v539
          %v397 = vphi 4294967295, %v542
          %v398 = vphi 0.0, %v548
          %v399 = vphi 0.0, %v550
          %v400 = vphi 0.0, %v552
          %v401 = vphi 0.0, %v554
        $region50: #{tpu_custom_call.1} parent=27 // loop_header_branch
          %392 = sbr.rel (%p390) target = $region54
        $region51: #{tpu_custom_call.1} parent=27 // loop_body
          %vm402 = vcmask 7168
          %v403 = vsel %vm402, %v394, -inf
          %404 = vmax.xlane.f32.xlu0 %v403
          %v405 = vpop.xlane.xlu0 %404
          %v406 = vrot.slane %v405, 4
          %v407 = vmax.f32 %v405, %v406
          %v408 = vrot.slane %v407, 2
          %v409 = vmax.f32 %v407, %v408
          %v410 = vrot.slane %v409, 1
          %v411 = vmax.f32 %v409, %v410
          %s412 = vtos %v411
          %p413 = scmp.gt.f32.partialorder %s412, -5e+29
          %v414 = vstv %s412
          %vm415 = vcmp.eq.f32.partialorder %v394, %v414
          %v416 = vsel %vm415, %v284, 8
          %v417 = vsel %vm402, %v416, 2147483647
          %v418 = vand.u32 %v417, 65535
          %v419 = vshra.s32 %v417, 16
          %v420 = vcvt.s32.f32 %v418
          %v421 = vcvt.s32.f32 %v419
          %422 = vmin.xlane.f32.xlu0 %v421
          %v423 = vpop.xlane.xlu0 %422
          %vm424 = vcmp.eq.f32.partialorder %v421, %v423
          %v425 = vsel %vm424, %v420, inf
          %426 = vmin.xlane.f32.xlu0 %v425
          %v427 = vpop.xlane.xlu0 %426
          %v428 = vcvt.f32.s32 %v427
          %v429 = vcvt.f32.s32 %v423
          %v430 = vshll.u32 %v429, 16
          %v431 = vadd.s32 %v430, %v428
          %v432 = vrot.slane %v431, 4
          %vm433 = vcmp.lt.s32.totalorder %v431, %v432
          %v434 = vsel %vm433, %v431, %v432
          %v435 = vrot.slane %v434, 2
          %vm436 = vcmp.lt.s32.totalorder %v434, %v435
          %v437 = vsel %vm436, %v434, %v435
          %v438 = vrot.slane %v437, 1
          %vm439 = vcmp.lt.s32.totalorder %v437, %v438
          %v440 = vsel %vm439, %v437, %v438
          %s441 = vtos %v440
          %v442 = vstv %s441
          %vm443 = vcmp.eq.s32.totalorder %v284, %v442
          %v444 = vsel %vm443, %v395, 0
          %v445 = vrot.slane %v444, 4
          %v446 = vadd.s32 %v444, %v445
          %v447 = vrot.slane %v446, 2
          %v448 = vadd.s32 %v446, %v447
          %v449 = vrot.slane %v448, 1
          %v450 = vadd.s32 %v448, %v449
          %s451 = vtos %v450
          %s452 = scalar_lea.vmem [#allocation4], %s441
          %v453 = vld [vmem:[%s452] sm:$0x1]
          %v454 = vstv %s451
          %vm455 = vcmp.eq.s32.totalorder %v282, %v454
          %v456 = vsel %vm455, %v453, 0
          %vm457 = vcmask 1040384
          %v458 = vsel %vm457, %v456, 0
          %v459 = vand.u32 %v458, 65535
          %v460 = vshrl.u32 %v458, 16
          %v461 = vcvt.s32.f32 %v459
          %v462 = vcvt.s32.f32 %v460
          %463 = vadd.xlane.f32.xlu0 %v461
          %v464 = vpop.xlane.xlu0 %463
          %465 = vadd.xlane.f32.xlu0 %v462
          %v466 = vpop.xlane.xlu0 %465
          %v467 = vcvt.f32.s32 %v464
          %v468 = vcvt.f32.s32 %v466
          %v469 = vshll.u32 %v468, 16
          %v470 = vadd.s32 %v469, %v467
          %v471 = vrot.slane %v470, 4
          %v472 = vadd.s32 %v470, %v471
          %v473 = vrot.slane %v472, 2
          %v474 = vadd.s32 %v472, %v473
          %v475 = vrot.slane %v474, 1
          %v476 = vadd.s32 %v474, %v475
          %s477 = vtos %v476
          %s478 = scalar_lea.vmem %s231, %s441 [#allocation9]
          %v479 = vld [vmem:[%s478] sm:$0x1]
          %v480 = vstv %s477
          %vm481 = vcmp.eq.s32.totalorder %v282, %v480
          %v482 = vsel %vm481, %v479, 0.0
          %v483 = vsel %vm457, %v482, 0.0
          %484 = vadd.xlane.f32.xlu0 %v483
          %v485 = vpop.xlane.xlu0 %484
          %v486 = vrot.slane %v485, 4
          %v487 = vadd.f32 %v485, %v486
          %v488 = vrot.slane %v487, 2
          %v489 = vadd.f32 %v487, %v488
          %v490 = vrot.slane %v489, 1
          %v491 = vadd.f32 %v489, %v490
          %s492 = vtos %v491
          %s493 = sadd.s32 %s441, 8
          %s494 = scalar_lea.vmem %s231, %s493 [#allocation9]
          %v495 = vld [vmem:[%s494] sm:$0x1]
          %v496 = vsel %vm481, %v495, 0.0
          %v497 = vsel %vm457, %v496, 0.0
          %498 = vadd.xlane.f32.xlu0 %v497
          %v499 = vpop.xlane.xlu0 %498
          %v500 = vrot.slane %v499, 4
          %v501 = vadd.f32 %v499, %v500
          %v502 = vrot.slane %v501, 2
          %v503 = vadd.f32 %v501, %v502
          %v504 = vrot.slane %v503, 1
          %v505 = vadd.f32 %v503, %v504
          %s506 = vtos %v505
          %s507 = sadd.s32 %s441, 16
          %s508 = scalar_lea.vmem %s231, %s507 [#allocation9]
          %v509 = vld [vmem:[%s508] sm:$0x1]
          %v510 = vsel %vm481, %v509, 0.0
          %v511 = vsel %vm457, %v510, 0.0
          %512 = vadd.xlane.f32.xlu0 %v511
          %v513 = vpop.xlane.xlu0 %512
          %v514 = vrot.slane %v513, 4
          %v515 = vadd.f32 %v513, %v514
          %v516 = vrot.slane %v515, 2
          %v517 = vadd.f32 %v515, %v516
          %v518 = vrot.slane %v517, 1
          %v519 = vadd.f32 %v517, %v518
          %s520 = vtos %v519
          %s521 = sadd.s32 %s441, 24
          %s522 = scalar_lea.vmem %s231, %s521 [#allocation9]
          %v523 = vld [vmem:[%s522] sm:$0x1]
          %v524 = vsel %vm481, %v523, 0.0
          %v525 = vsel %vm457, %v524, 0.0
          %526 = vadd.xlane.f32.xlu0 %v525
          %v527 = vpop.xlane.xlu0 %526
          %v528 = vrot.slane %v527, 4
          %v529 = vadd.f32 %v527, %v528
          %v530 = vrot.slane %v529, 2
          %v531 = vadd.f32 %v529, %v530
          %v532 = vrot.slane %v531, 1
          %v533 = vadd.f32 %v531, %v532
          %s534 = vtos %v533
          %v535 = vstv %s389
          %vm536 = vcmp.eq.s32.totalorder %v282, %v535
          %s537 = scalar_select %p413, %s412, -1.0
          %v538 = vstv %s537
          %v539 = vsel %vm536, %v538, %v396
          %s540 = scalar_select %p413, %s441, 4294967295
          %v541 = vstv %s540
          %v542 = vsel %vm536, %v541, %v397
          %s543 = scalar_select %p413, 1, 0
          %v544 = vstv %s543
          %vm545 = vcmp.eq.s32.totalorder %v544, 1
          %vm546 = vmand %vm536, %vm545
          %v547 = vstv %s492
          %v548 = vsel %vm546, %v547, %v398
          %v549 = vstv %s506
          %v550 = vsel %vm546, %v549, %v399
          %v551 = vstv %s520
          %v552 = vsel %vm546, %v551, %v400
          %v553 = vstv %s534
          %v554 = vsel %vm546, %v553, %v401
          %s555 = sadd.s32 %s451, 1
          %s556 = scalar_lea.vmem [#allocation3], %s441
          %v557 = vld [vmem:[%s556] sm:$0x1]
          %v558 = vstv %s555
          %vm559 = vcmp.eq.s32.totalorder %v282, %v558
          %v560 = vsel %vm559, %v557, -1e+30
          %v561 = vsel %vm457, %v560, -inf
          %562 = vmax.xlane.f32.xlu0 %v561
          %v563 = vpop.xlane.xlu0 %562
          %v564 = vrot.slane %v563, 4
          %v565 = vmax.f32 %v563, %v564
          %v566 = vrot.slane %v565, 2
          %v567 = vmax.f32 %v565, %v566
          %v568 = vrot.slane %v567, 1
          %v569 = vmax.f32 %v567, %v568
          %s570 = vtos %v569
          %vm571 = vmand %vm443, %vm545
          %v572 = vstv %s570
          %v573 = vsel %vm571, %v572, %v394
          %v574 = vsel %vm571, %v558, %v395
        $region52: #{tpu_custom_call.1} parent=27 // loop_footer
          %s393 = sadd.s32 1, %s389
        $region53: #{tpu_custom_call.1} parent=27 // loop_footer_branch
          %388 = sbr.rel target = $region49
        $region54: #{tpu_custom_call.1} parent=27 // loop_exit
          _
        %vm575 = vcmask 1040384
        %v576 = vsel %vm575, %v398, %v399
        %vm577 = vcmask 1041408
        %v578 = vsel %vm577, %v576, %v400
        %vm579 = vcmask 1042432
        %v580 = vsel %vm579, %v578, %v401
        %581 = vst [vmem:[%s256] sm:$0xf] %v580
        %582 = vst [vmem:[%s262] sm:$0x1] %v396
        %583 = vst [vmem:[%s268] sm:$0x1] %v397
        %s584 = sand.u32 %s88, 1
        %s585 = scalar_lea.sflag [#allocation8], %s584
        %s586 = sand.u32 %s88, 1
        %s587 = smul.addr %s586, 4
        %s588 = scalar_lea.vmem [#allocation11], %s587
        %s589 = sand.u32 %s28, 1
        %s590 = scalar_lea.sflag [#allocation13], %s589
        %s591 = sand.u32 %s114, 1
        %s592 = scalar_lea.vmem [#allocation12], %s591
        %s593 = sand.u32 %s28, 1
        %s594 = scalar_lea.sflag [#allocation13], %s593
        %s595 = sand.u32 %s140, 1
        %s596 = scalar_lea.vmem [#allocation14], %s595
        // Predicated region
        $region55: #{tpu_custom_call.1} parent=27 // pred_check
          %p597 = pneg %p98
        $region56: #{tpu_custom_call.1} parent=27 // pred_check_branch
          %599 = sbr.rel (%p597) target = $region58
        $region57: #{tpu_custom_call.1} parent=27 // pred_region
          %s601 = ssub.s32 64, 64
          %602 = vsyncadd %s585, %s601
          %s603 = smul.addr %s28, 64
          %s604 = scalar_lea.hbm %s2, %s603
          %s606 = sshll.u32 %s588, 4
          %s607 = int_to_ptr.vmem [resolvable:$true] %s606
          %609 = dma.vmem_to_hbm [thread:$0]  %s607, 64, %s604, %s585
        $region58: #{tpu_custom_call.1} parent=27 // pred_fallthru
          _
        // Predicated region
        $region59: #{tpu_custom_call.1} parent=27 // pred_check
          %p610 = pneg %p124
        $region60: #{tpu_custom_call.1} parent=27 // pred_check_branch
          %612 = sbr.rel (%p610) target = $region62
        $region61: #{tpu_custom_call.1} parent=27 // pred_region
          %s614 = ssub.s32 16, 16
          %615 = vsyncadd %s590, %s614
          %s616 = smul.addr %s28, 16
          %s617 = scalar_lea.hbm %s3, %s616
          %s619 = sshll.u32 %s592, 4
          %s620 = int_to_ptr.vmem [resolvable:$true] %s619
          %622 = dma.vmem_to_hbm [thread:$0]  %s620, 16, %s617, %s590
        $region62: #{tpu_custom_call.1} parent=27 // pred_fallthru
          _
        // Predicated region
        $region63: #{tpu_custom_call.1} parent=27 // pred_check
          %p623 = pneg %p150
        $region64: #{tpu_custom_call.1} parent=27 // pred_check_branch
          %625 = sbr.rel (%p623) target = $region66
        $region65: #{tpu_custom_call.1} parent=27 // pred_region
          %s627 = ssub.s32 16, 16
          %628 = vsyncadd %s594, %s627
          %s629 = smul.addr %s28, 16
          %s630 = scalar_lea.hbm %s4, %s629
          %s632 = sshll.u32 %s596, 4
          %s633 = int_to_ptr.vmem [resolvable:$true] %s632
          %635 = dma.vmem_to_hbm [thread:$0]  %s633, 16, %s630, %s594
        $region66: #{tpu_custom_call.1} parent=27 // pred_fallthru
          _
      $region28: #{tpu_custom_call.1} parent=5 // pred_fallthru
        _
      %p636 = scmp.le.s32.totalorder 2, %s23
      // Predicated region
      $region67: #{tpu_custom_call.1} parent=5 // pred_check
        %p637 = pneg %p636
      $region68: #{tpu_custom_call.1} parent=5 // pred_check_branch
        %639 = sbr.rel (%p637) target = $region70
      $region69: #{tpu_custom_call.1} parent=5 // pred_region
        %s640 = ssub.s32 %s23, 2
        // Predicated region
        $region71: #{tpu_custom_call.1} parent=69 // pred_check
          %p641 = pneg %p104
        $region72: #{tpu_custom_call.1} parent=69 // pred_check_branch
          %643 = sbr.rel (%p641) target = $region74
        $region73: #{tpu_custom_call.1} parent=69 // pred_region
          %s644 = sand.u32 %s89, 1
          %s645 = scalar_lea.sflag [#allocation8], %s644
          %s646 = sand.u32 %s89, 1
          %s647 = smul.addr %s646, 4
          %s648 = scalar_lea.vmem [#allocation11], %s647
          %649 = dma.done %s645, 64
        $region74: #{tpu_custom_call.1} parent=69 // pred_fallthru
          _
        // Predicated region
        $region75: #{tpu_custom_call.1} parent=69 // pred_check
          %p650 = pneg %p130
        $region76: #{tpu_custom_call.1} parent=69 // pred_check_branch
          %652 = sbr.rel (%p650) target = $region78
        $region77: #{tpu_custom_call.1} parent=69 // pred_region
          %s653 = sand.u32 %s29, 1
          %s654 = scalar_lea.sflag [#allocation13], %s653
          %s655 = sand.u32 %s115, 1
          %s656 = scalar_lea.vmem [#allocation12], %s655
          %657 = dma.done %s654, 16
        $region78: #{tpu_custom_call.1} parent=69 // pred_fallthru
          _
        // Predicated region
        $region79: #{tpu_custom_call.1} parent=69 // pred_check
          %p658 = pneg %p156
        $region80: #{tpu_custom_call.1} parent=69 // pred_check_branch
          %660 = sbr.rel (%p658) target = $region82
        $region81: #{tpu_custom_call.1} parent=69 // pred_region
          %s661 = sand.u32 %s29, 1
          %s662 = scalar_lea.sflag [#allocation13], %s661
          %s663 = sand.u32 %s141, 1
          %s664 = scalar_lea.vmem [#allocation14], %s663
          %665 = dma.done %s662, 16
        $region82: #{tpu_custom_call.1} parent=69 // pred_fallthru
          _
      $region70: #{tpu_custom_call.1} parent=5 // pred_fallthru
        _
    $region6: #{tpu_custom_call.1} parent=1 // loop_footer
      %s27 = sadd.s32 1, %s23
    $region7: #{tpu_custom_call.1} parent=1 // loop_footer_branch
      %22 = sbr.rel target = $region3
    $region8: #{tpu_custom_call.1} parent=1 // loop_exit
      _
    %666 = vsyncpa [#allocation7], 1
    %s667 = scalar_lea.sflag [#allocation7], 1
    %668 = vsyncpa %s667, 1
    %669 = vsyncpa [#allocation10], 1
    %s670 = scalar_lea.sflag [#allocation10], 1
    %671 = vsyncpa %s670, 1
    %672 = vsyncpa [#allocation8], 1
    %s673 = scalar_lea.sflag [#allocation8], 1
    %674 = vsyncpa %s673, 1
    %675 = vsyncpa [#allocation13], 1
    %s676 = scalar_lea.sflag [#allocation13], 1
    %677 = vsyncpa %s676, 1

</llo_original>
